<compile_context>
chip_gen: v7x
topology: tpu7x:2x2x1
jax: 0.10.0
libtpu: 0.0.40
codegen_flags: <defaults>
</compile_context>

<pallas_src>
import math

import jax
import jax.numpy as jnp
from jax.experimental import pallas as pl
from jax.experimental.pallas import tpu as pltpu


def _controller_kernel(lat_ref, rec_ref, wlat_ref, wrec_ref, b_ref, out_ref):
    """Feature-major controller step.

    lat_ref : (L, TB)  activations, batch on the lane axis
    rec_ref : (R, TB)
    wlat_ref: (A, L)   nn.Linear weight, latent columns   (bf16)
    wrec_ref: (A, R)   nn.Linear weight, recurrent columns (bf16)
    b_ref   : (A, 1)   bias (float32)
    out_ref : (A, TB)
    """
    acc = jnp.dot(wlat_ref[...], lat_ref[...], preferred_element_type=jnp.float32)
    acc = acc + jnp.dot(wrec_ref[...], rec_ref[...], preferred_element_type=jnp.float32)
    out_ref[...] = (acc + b_ref[...]).astype(out_ref.dtype)


def make_controller_params(weight, bias, latents_dim, param_dtype=jnp.bfloat16):
    """One-time parameter prep (call at init, NOT in the hot path).

    weight: (A, L+R) in PyTorch nn.Linear layout, bias: (A,).
    Returns w_lat (A, L), w_rec (A, R) in `param_dtype` and bias (A, 1) float32.
    """
    A = weight.shape[0]
    L = latents_dim
    w_lat = jnp.asarray(weight[:, :L], dtype=param_dtype)   # (A, L)
    w_rec = jnp.asarray(weight[:, L:], dtype=param_dtype)   # (A, R)
    b_col = jnp.asarray(bias, dtype=jnp.float32).reshape(A, 1)
    return w_lat, w_rec, b_col


def _nbytes(shape, dtype):
    return math.prod(shape) * jnp.dtype(dtype).itemsize


def controller_forward_fm(lat_t, rec_t, w_lat, w_rec, b_col, out_dtype=None):
    """Feature-major forward.

    lat_t: (L, B), rec_t: (R, B)  -> out: (A, B)
    out[:, i] == W @ concat([lat_t[:, i], rec_t[:, i]]) + b, i.e. the transpose
    of the PyTorch Controller output for batch-major inputs lat_t.T / rec_t.T.
    """
    L, B = lat_t.shape
    R, Br = rec_t.shape
    assert B == Br, "latents / recurrents batch mismatch"
    A = w_lat.shape[0]
    out_dtype = out_dtype if out_dtype is not None else lat_t.dtype

    cost = pl.CostEstimate(
        flops=2 * B * (L + R) * A,
        transcendentals=0,
        bytes_accessed=(_nbytes((L, B), lat_t.dtype) + _nbytes((R, B), rec_t.dtype)
                        + _nbytes((A, L), w_lat.dtype) + _nbytes((A, R), w_rec.dtype)
                        + _nbytes((A, 1), b_col.dtype) + _nbytes((A, B), out_dtype)),
    )
    out_shape = jax.ShapeDtypeStruct((A, B), out_dtype)

    # Batch tile on the lane axis: largest candidate that yields >= 2 grid
    # steps (so both v7x TensorCores get work); 256/128 dropped (step-overhead
    # bound).  Tiny batches go gridless (whole operands are < 0.25 MiB VMEM).
    tb = None
    for cand in (4096, 2048, 1024, 512):
        if 2 * cand <= B:
            tb = cand
            break

    if tb is None:
        # Small batch: single gridless invocation -- no pipeline prologue /
        # epilogue, no double-buffering; everything VMEM-resident once.
        return pl.pallas_call(
            _controller_kernel,
            out_shape=out_shape,
            cost_estimate=cost,
        )(lat_t, rec_t, w_lat, w_rec, b_col)

    grid = (pl.cdiv(B, tb),)  # ragged last tile handled (masked) by Pallas
    return pl.pallas_call(
        _controller_kernel,
        out_shape=out_shape,
        grid_spec=pltpu.PrefetchScalarGridSpec(
            num_scalar_prefetch=0,
            grid=grid,
            in_specs=[
                pl.BlockSpec((L, tb), lambda i: (0, i)),
                pl.BlockSpec((R, tb), lambda i: (0, i)),
                pl.BlockSpec((A, L), lambda i: (0, 0)),   # weights VMEM-resident
                pl.BlockSpec((A, R), lambda i: (0, 0)),
                pl.BlockSpec((A, 1), lambda i: (0, 0)),
            ],
            out_specs=pl.BlockSpec((A, tb), lambda i: (0, i)),
        ),
        compiler_params=pltpu.CompilerParams(
            # Batch tiles are independent; on v7x, pltpu.CORE_PARALLEL can be
            # substituted here to force cross-TensorCore sharding.
            dimension_semantics=("parallel",)),
        cost_estimate=cost,
    )(lat_t, rec_t, w_lat, w_rec, b_col)


if __name__ == "__main__":
    LATENTS, RECURRENTS, ACTIONS = 32, 64, 8

    key = jax.random.PRNGKey(0)
    k_w, k_b, k_lat_s, k_rec_s, k_lat_b, k_rec_b = jax.random.split(key, 6)

    # nn.Linear-style init: U(-1/sqrt(fan_in), +1/sqrt(fan_in)).
    fan_in = LATENTS + RECURRENTS
    bound = 1.0 / (fan_in ** 0.5)
    weight = jax.random.uniform(k_w, (ACTIONS, fan_in), minval=-bound, maxval=bound,
                                dtype=jnp.float32)
    bias = jax.random.uniform(k_b, (ACTIONS,), minval=-bound, maxval=bound,
                              dtype=jnp.float32)

    # One-time parameter prep: split weight, cast to bf16, column bias (f32).
    w_lat, w_rec, b_col = make_controller_params(weight, bias, LATENTS)

    fwd = jax.jit(controller_forward_fm)

    def reference(lat_t, rec_t):
        # Original PyTorch semantics (batch-major), computed in f32 from the
        # same bf16-rounded activations / weights.
        cat = jnp.concatenate([lat_t.T, rec_t.T], axis=1).astype(jnp.float32)
        w32 = jnp.concatenate([w_lat, w_rec], axis=1).astype(jnp.float32)  # (A, L+R)
        return cat @ w32.T + bias  # (B, A)

    # --- Small batch: gridless path (feature-major, bf16 activations) ---
    B_small = 4
    lat_s = jax.random.normal(k_lat_s, (LATENTS, B_small), dtype=jnp.float32).astype(jnp.bfloat16)
    rec_s = jax.random.normal(k_rec_s, (RECURRENTS, B_small), dtype=jnp.float32).astype(jnp.bfloat16)
    out_s = jax.block_until_ready(fwd(lat_s, rec_s, w_lat, w_rec, b_col))
    assert out_s.shape == (ACTIONS, B_small) and out_s.dtype == jnp.bfloat16
    ref_s = reference(lat_s, rec_s)
    assert jnp.allclose(out_s.T.astype(jnp.float32), ref_s, atol=3e-2, rtol=3e-2)

    # --- Batched rollout: cdiv grid with a ragged last tile (2304 = 2*1024+256),
    #     weights VMEM-resident, batch axis "parallel" ---
    B_big = 2304
    lat_b = jax.random.normal(k_lat_b, (LATENTS, B_big), dtype=jnp.float32).astype(jnp.bfloat16)
    rec_b = jax.random.normal(k_rec_b, (RECURRENTS, B_big), dtype=jnp.float32).astype(jnp.bfloat16)
    out_b = jax.block_until_ready(fwd(lat_b, rec_b, w_lat, w_rec, b_col))
    assert out_b.shape == (ACTIONS, B_big) and out_b.dtype == jnp.bfloat16
    ref_b = reference(lat_b, rec_b)
    assert jnp.allclose(out_b.T.astype(jnp.float32), ref_b, atol=3e-2, rtol=3e-2)

    print("KERNEL_OK")
</pallas_src>

<mosaic_0001>
module attributes {stable_mosaic.version = 11 : i64} {
  func.func @_controller_kernel(%arg0: memref<32x4xbf16, #tpu.memory_space<vmem>>, %arg1: memref<64x4xbf16, #tpu.memory_space<vmem>>, %arg2: memref<8x32xbf16, #tpu.memory_space<vmem>>, %arg3: memref<8x64xbf16, #tpu.memory_space<vmem>>, %arg4: memref<8x1xf32, #tpu.memory_space<vmem>>, %arg5: memref<8x4xbf16, #tpu.memory_space<vmem>>) attributes {dimension_semantics = [], scalar_prefetch = 0 : i64, scratch_operands = 0 : i64, tpu.core_type = #tpu.core_type<tc>} {
    %c0 = arith.constant 0 : index
    %c0_0 = arith.constant 0 : index
    %0 = vector.load %arg2[%c0, %c0_0] : memref<8x32xbf16, #tpu.memory_space<vmem>>, vector<8x32xbf16>
    %c0_1 = arith.constant 0 : index
    %c0_2 = arith.constant 0 : index
    %1 = vector.load %arg0[%c0_1, %c0_2] : memref<32x4xbf16, #tpu.memory_space<vmem>>, vector<32x4xbf16>
    %cst = arith.constant dense<0.000000e+00> : vector<8x4xf32>
    %2 = tpu.matmul %0, %1, %cst {dimension_numbers = #tpu.dot_dimension_numbers<[1], [0], [0], [1], [0, 0, 1, 1], [], []>} : vector<8x32xbf16>, vector<32x4xbf16>, vector<8x4xf32> -> vector<8x4xf32>
    %c0_3 = arith.constant 0 : index
    %c0_4 = arith.constant 0 : index
    %3 = vector.load %arg3[%c0_3, %c0_4] : memref<8x64xbf16, #tpu.memory_space<vmem>>, vector<8x64xbf16>
    %c0_5 = arith.constant 0 : index
    %c0_6 = arith.constant 0 : index
    %4 = vector.load %arg1[%c0_5, %c0_6] : memref<64x4xbf16, #tpu.memory_space<vmem>>, vector<64x4xbf16>
    %cst_7 = arith.constant dense<0.000000e+00> : vector<8x4xf32>
    %5 = tpu.matmul %3, %4, %cst_7 {dimension_numbers = #tpu.dot_dimension_numbers<[1], [0], [0], [1], [0, 0, 1, 1], [], []>} : vector<8x64xbf16>, vector<64x4xbf16>, vector<8x4xf32> -> vector<8x4xf32>
    %6 = arith.addf %2, %5 : vector<8x4xf32>
    %c0_8 = arith.constant 0 : index
    %c0_9 = arith.constant 0 : index
    %7 = vector.load %arg4[%c0_8, %c0_9] : memref<8x1xf32, #tpu.memory_space<vmem>>, vector<8x1xf32>
    %8 = vector.broadcast %7 : vector<8x1xf32> to vector<8x4xf32>
    %9 = arith.addf %6, %8 : vector<8x4xf32>
    %10 = arith.truncf %9 : vector<8x4xf32> to vector<8x4xbf16>
    %c0_10 = arith.constant 0 : index
    %c0_11 = arith.constant 0 : index
    %11 = vector.load %arg5[%c0_10, %c0_11] : memref<8x4xbf16, #tpu.memory_space<vmem>>, vector<8x4xbf16>
    tpu.vector_store %arg5[%c0_10, %c0_11], %10 {strides = array<i32>} : memref<8x4xbf16, #tpu.memory_space<vmem>>, vector<8x4xbf16>,
    return
  }
}

</mosaic_0001>

<llo_original>
// kernel: controller_forward_fm.1
$region0: #{controller_forward_fm.1}
  #allocation0 [shape = 'u32[]', space=smem, size = 0x4, offset = 0x4, fixed_abs, tag = 'smem constant byte address 0x4 - core index']
  #allocation1 [shape = 'u32[144,128]{1,0:T(1,128)}', space=vmem, size = 0x12000, scoped, tag = 'internal scratch']
  %s0 = inlined_call_operand.vmem [shape: bf16[32,4], index: 0, kind: input, shape index: {}]
  %s1 = inlined_call_operand.vmem [shape: bf16[64,4], index: 1, kind: input, shape index: {}]
  %s2 = inlined_call_operand.vmem [shape: bf16[8,32], index: 2, kind: input, shape index: {}]
  %s3 = inlined_call_operand.vmem [shape: bf16[8,64], index: 3, kind: input, shape index: {}]
  %s4 = inlined_call_operand.vmem [shape: f32[8,1], index: 4, kind: input, shape index: {}]
  %s5 = inlined_call_operand.vmem [shape: bf16[8,4], index: 5, kind: output, shape index: {}]
  %s6 = sld [smem:[#allocation0]]
  $region30: #{controller_forward_fm.1} parent=0
    _
  %s8 = ssub.s32 1, %s6
  %s9 = scalar_select 0, %s8, %s6
  // Predicated region
  $region2: #{controller_forward_fm.1} parent=0 // pred_check
    _
  $region3: #{controller_forward_fm.1} parent=0 // pred_check_branch
    %11 = sbr.rel (0) target = $region5
  $region4: #{controller_forward_fm.1} parent=0 // pred_region
    _
  $region5: #{controller_forward_fm.1} parent=0 // pred_fallthru
    _
  // Predicated region
  $region6: #{controller_forward_fm.1} parent=0 // pred_check
    _
  $region7: #{controller_forward_fm.1} parent=0 // pred_check_branch
    %13 = sbr.rel (0) target = $region9
  $region8: #{controller_forward_fm.1} parent=0 // pred_region
    _
  $region9: #{controller_forward_fm.1} parent=0 // pred_fallthru
    _
  // Predicated region
  $region10: #{controller_forward_fm.1} parent=0 // pred_check
    _
  $region11: #{controller_forward_fm.1} parent=0 // pred_check_branch
    %15 = sbr.rel (0) target = $region13
  $region12: #{controller_forward_fm.1} parent=0 // pred_region
    _
  $region13: #{controller_forward_fm.1} parent=0 // pred_fallthru
    _
  // Predicated region
  $region14: #{controller_forward_fm.1} parent=0 // pred_check
    _
  $region15: #{controller_forward_fm.1} parent=0 // pred_check_branch
    %17 = sbr.rel (0) target = $region17
  $region16: #{controller_forward_fm.1} parent=0 // pred_region
    _
  $region17: #{controller_forward_fm.1} parent=0 // pred_fallthru
    _
  // Predicated region
  $region18: #{controller_forward_fm.1} parent=0 // pred_check
    _
  $region19: #{controller_forward_fm.1} parent=0 // pred_check_branch
    %19 = sbr.rel (0) target = $region21
  $region20: #{controller_forward_fm.1} parent=0 // pred_region
    _
  $region21: #{controller_forward_fm.1} parent=0 // pred_fallthru
    _
  %v21 = vld [vmem:[%s2] sm:$0xf]
  %v22 = vld [vmem:[%s0] sm:$0xf]
  %v23 = vld [vmem:[%s0 + $0x4] sm:$0xf]
  %v24 = vld [vmem:[%s0 + $0x8] sm:$0xf]
  %v25 = vld [vmem:[%s0 + $0xc] sm:$0xf]
  %v26 = vld [vmem:[%s3] sm:$0xf]
  %v27 = vld [vmem:[%s1] sm:$0xf]
  %v28 = vld [vmem:[%s1 + $0x4] sm:$0xf]
  %v29 = vld [vmem:[%s1 + $0x8] sm:$0xf]
  %v30 = vld [vmem:[%s1 + $0xc] sm:$0xf]
  %v31 = vld [vmem:[%s1 + $0x10] sm:$0xf]
  %v32 = vld [vmem:[%s1 + $0x14] sm:$0xf]
  %v33 = vld [vmem:[%s1 + $0x18] sm:$0xf]
  %v34 = vld [vmem:[%s1 + $0x1c] sm:$0xf]
  %v43 = vunpack.c.l.b16 %v27
  %v44 = vunpack.c.l.b16 %v28
  %v45 = vunpack.c.l.b16 %v29
  %v46 = vunpack.c.l.b16 %v30
  %v47 = vunpack.c.l.b16 %v31
  %v48 = vunpack.c.l.b16 %v32
  %v49 = vunpack.c.l.b16 %v33
  %v50 = vunpack.c.l.b16 %v34
  %v51 = vpack.c.b16 %v44, %v43
  %v52 = vpack.c.b16 %v46, %v45
  %v53 = vpack.c.b16 %v48, %v47
  %v54 = vpack.c.b16 %v50, %v49
  %vm59 = vcmask 523264
  %v61 = vsel %vm59, %v26, 0
  %63 = vmatprep.subr.bf16.mxu0 0
  %64 = vmatpush1.bf16.msra.mxu0 %v51
  %65 = vmatprep.subr.bf16.mxu0 0
  %66 = vmatpush1.bf16.msra.mxu0 %v52
  %67 = vmatprep.subr.bf16.mxu0 0
  %68 = vmatpush1.bf16.msra.mxu0 %v53
  %69 = vmatprep.subr.bf16.mxu0 0
  %70 = vmatpush1.bf16.msra.mxu0 %v54
  %71 = vmatprep.subr.bf16.mxu0 0
  %72 = vmatpush1.bf16.msra.mxu0 0
  %73 = vmatprep.subr.bf16.mxu0 0
  %74 = vmatpush1.bf16.msra.mxu0 0
  %75 = vmatprep.subr.bf16.mxu0 0
  %76 = vmatpush1.bf16.msra.mxu0 0
  %77 = vmatprep.subr.bf16.mxu0 0
  %78 = vmatpush1.bf16.msra.mxu0 0
  %79 = vmatprep.subr.bf16.mxu0 0
  %80 = vmatpush1.bf16.msra.mxu0 0
  %81 = vmatprep.subr.bf16.mxu0 0
  %82 = vmatpush1.bf16.msra.mxu0 0
  %83 = vmatprep.subr.bf16.mxu0 0
  %84 = vmatpush1.bf16.msra.mxu0 0
  %85 = vmatprep.subr.bf16.mxu0 0
  %86 = vmatpush1.bf16.msra.mxu0 0
  %87 = vmatprep.subr.bf16.mxu0 0
  %88 = vmatpush1.bf16.msra.mxu0 0
  %89 = vmatprep.subr.bf16.mxu0 0
  %90 = vmatpush1.bf16.msra.mxu0 0
  %91 = vmatprep.subr.bf16.mxu0 0
  %92 = vmatpush1.bf16.msra.mxu0 0
  %93 = vmatprep.subr.bf16.mxu0 0
  %94 = vmatpush1.bf16.msra.mxu0 0
  %95 = vmatprep.mubr.bf16.mxu0 0
  %96 = vmatmul.mubr.bf16.gmra.mrb[0].mxu0 %v61
  %v97 = vpop.f32.mrb[0].mxu0
  %v98 = vadd.f32 0.0, %v97
  %v99 = vpop.f32.mrb[0].mxu0
  %v100 = vpop.f32.mrb[0].mxu0
  %v101 = vpop.f32.mrb[0].mxu0
  %102 = vdwg.mxu0
  %v107 = vunpack.c.l.b16 %v22
  %v108 = vunpack.c.l.b16 %v23
  %v109 = vunpack.c.l.b16 %v24
  %v110 = vunpack.c.l.b16 %v25
  %v111 = vpack.c.b16 %v108, %v107
  %v112 = vpack.c.b16 %v110, %v109
  %vm115 = vcmask 261120
  %v117 = vsel %vm115, %v21, 0
  %119 = vmatprep.subr.bf16.mxu0 0
  %120 = vmatpush1.bf16.msra.mxu0 %v111
  %121 = vmatprep.subr.bf16.mxu0 0
  %122 = vmatpush1.bf16.msra.mxu0 %v112
  %123 = vmatprep.subr.bf16.mxu0 0
  %124 = vmatpush1.bf16.msra.mxu0 0
  %125 = vmatprep.subr.bf16.mxu0 0
  %126 = vmatpush1.bf16.msra.mxu0 0
  %127 = vmatprep.subr.bf16.mxu0 0
  %128 = vmatpush1.bf16.msra.mxu0 0
  %129 = vmatprep.subr.bf16.mxu0 0
  %130 = vmatpush1.bf16.msra.mxu0 0
  %131 = vmatprep.subr.bf16.mxu0 0
  %132 = vmatpush1.bf16.msra.mxu0 0
  %133 = vmatprep.subr.bf16.mxu0 0
  %134 = vmatpush1.bf16.msra.mxu0 0
  %135 = vmatprep.subr.bf16.mxu0 0
  %136 = vmatpush1.bf16.msra.mxu0 0
  %137 = vmatprep.subr.bf16.mxu0 0
  %138 = vmatpush1.bf16.msra.mxu0 0
  %139 = vmatprep.subr.bf16.mxu0 0
  %140 = vmatpush1.bf16.msra.mxu0 0
  %141 = vmatprep.subr.bf16.mxu0 0
  %142 = vmatpush1.bf16.msra.mxu0 0
  %143 = vmatprep.subr.bf16.mxu0 0
  %144 = vmatpush1.bf16.msra.mxu0 0
  %145 = vmatprep.subr.bf16.mxu0 0
  %146 = vmatpush1.bf16.msra.mxu0 0
  %147 = vmatprep.subr.bf16.mxu0 0
  %148 = vmatpush1.bf16.msra.mxu0 0
  %149 = vmatprep.subr.bf16.mxu0 0
  %150 = vmatpush1.bf16.msra.mxu0 0
  %151 = vmatprep.mubr.bf16.mxu0 0
  %152 = vmatmul.mubr.bf16.gmra.mrb[0].mxu0 %v117
  %v153 = vpop.f32.mrb[0].mxu0
  %v154 = vadd.f32 %v98, %v153
  %v155 = vpop.f32.mrb[0].mxu0
  %v156 = vpop.f32.mrb[0].mxu0
  %v157 = vpop.f32.mrb[0].mxu0
  %158 = vdwg.mxu0
  %v159 = vld [vmem:[%s4] sm:$0xff]
  %161 = vset.pattern.permute.xlu0 0
  %162 = vperm.xlu0 %161, %v159
  %v163 = vpop.permute.xlu0 %162
  %v165 = vadd.f32 %v154, %v163
  %v166 = vpack.c.bf16 %v165, %v165
  %vm167 = vcmask 27648
  %168 = vst.msk [vmem:[%s5] sm:$0xf] %vm167, %v166
  // Predicated region
  $region22: #{controller_forward_fm.1} parent=0 // pred_check
    _
  $region23: #{controller_forward_fm.1} parent=0 // pred_check_branch
    %170 = sbr.rel (0) target = $region25
  $region24: #{controller_forward_fm.1} parent=0 // pred_region
    _
  $region25: #{controller_forward_fm.1} parent=0 // pred_fallthru
    _
  // Predicated region
  $region26: #{controller_forward_fm.1} parent=0 // pred_check
    _
  $region27: #{controller_forward_fm.1} parent=0 // pred_check_branch
    %172 = sbr.rel (0) target = $region29
  $region28: #{controller_forward_fm.1} parent=0 // pred_region
    _
  $region29: #{controller_forward_fm.1} parent=0 // pred_fallthru
    _

</llo_original>
